<compile_context>
chip_gen: v7x
topology: tpu7x:2x2x1
jax: 0.10.0
libtpu: 0.0.40
codegen_flags: <defaults>
</compile_context>

<pallas_src>
import functools

import jax
import jax.numpy as jnp
from jax.experimental import pallas as pl
from jax.experimental.pallas import tpu as pltpu


_NEG = -1e30  # f32 sentinel for "invalid neighbour" in the running max


def _round_up(x, m):
    return ((x + m - 1) // m) * m


def _tpu_target():
    """Best-effort chip detection -> (mxu_lane_width, tensorcores_per_chip)."""
    lanes, cores = 256, 1
    try:
        kind = jax.devices()[0].device_kind.lower()
        if any(v in kind for v in ("v2", "v3", "v4", "v5")):
            lanes = 128          # 128-wide MXU generations
        if "v7" in kind:
            cores = 2            # only v7x has 2 TensorCores per chip
    except Exception:
        pass
    return lanes, cores


# ---------------------------------------------------------------------------
# Pallas kernel: packed per-edge MLP + masked running max over neighbour groups
# ---------------------------------------------------------------------------
def _sa_kernel(x_ref, counts_ref, slot_ref, w1_ref, b1_ref, w2_ref, b2_ref,
               out_ref, *, slots_per_group):
    # x_ref:      (1, tile_c, P*D)  bf16  P neighbour slots packed along lanes
    # counts_ref: (tile_c, 1)       int32 valid-neighbour count per centroid
    # slot_ref:   (1, P*H)          int32 lane -> slot-within-group map
    # w1_ref:     (P*D, P*H) bf16 ; b1_ref: (1, P*H) f32   (block-diagonal)
    # w2_ref:     (P*H, P*H) bf16 ; b2_ref: (1, P*H) f32   (block-diagonal)
    # out_ref:    (tile_c, P*H) f32  running-max accumulator, resident across
    #                                the neighbour-group grid axis.
    kg = pl.program_id(1)

    @pl.when(kg == 0)
    def _init():
        out_ref[...] = jnp.full(out_ref.shape, _NEG, dtype=out_ref.dtype)

    x = x_ref[0]                                   # (tile_c, P*D)
    w1 = w1_ref[...]
    w2 = w2_ref[...]

    # One MXU pass per layer for P neighbour slots at once (block-diagonal W).
    z = jnp.dot(x, w1, preferred_element_type=jnp.float32) + b1_ref[...]
    z = jnp.maximum(z, 0.0)
    z = jnp.dot(z.astype(w2.dtype), w2,
                preferred_element_type=jnp.float32) + b2_ref[...]   # (tile_c, P*H)

    # Validity: lane-group p of this neighbour group is slot kg*P + p.
    slot = kg * slots_per_group + slot_ref[...]    # (1, P*H) int32
    valid = slot < counts_ref[...]                 # (tile_c, P*H) bool
    out_ref[...] = jnp.maximum(out_ref[...], jnp.where(valid, z, _NEG))


def pointnet_max_pallas(x_kcd, counts, params, *, tile_c_target=256,
                        compute_dtype=jnp.bfloat16, target_lanes=None,
                        num_cores=None):
    """Masked PointNet++ message + max aggregation.

    x_kcd:  (K, C, D) float  neighbour-major [h_j, pos_j - pos_i] features.
    counts: (C,)      int    number of valid neighbours per centroid (<= K).
    params: (w1 (D,H), b1 (1,H), w2 (H,H), b2 (1,H)).
    Returns (C, H) float32.
    """
    w1, b1, w2, b2 = params
    K, C, D = x_kcd.shape
    H = w2.shape[-1]
    assert w1.shape == (D, H) and w2.shape == (H, H)

    det_lanes, det_cores = _tpu_target()
    if target_lanes is None:
        target_lanes = det_lanes
    if num_cores is None:
        num_cores = det_cores

    # neighbour-slot packing factor P: packed output width P*H ~= MXU width.
    if H >= target_lanes:
        P = 1
    elif target_lanes % H == 0:
        P = target_lanes // H
    elif 128 % H == 0:
        P = 128 // H
    else:
        P = max(1, 128 // H)
    PH = P * H
    Dp = P * D

    # Block-diagonal packed weights (P copies of w1 / w2 on the diagonal).
    eye = jnp.eye(P, dtype=jnp.float32)
    w1_blk = jnp.kron(eye, w1.astype(jnp.float32)).astype(compute_dtype)   # (P*D, P*H)
    w2_blk = jnp.kron(eye, w2.astype(jnp.float32)).astype(compute_dtype)   # (P*H, P*H)
    b1_blk = jnp.tile(b1.reshape(1, H).astype(jnp.float32), (1, P))        # (1, P*H)
    b2_blk = jnp.tile(b2.reshape(1, H).astype(jnp.float32), (1, P))        # (1, P*H)
    lane_slot = jnp.repeat(jnp.arange(P, dtype=jnp.int32), H).reshape(1, PH)

    # centroid (parallel) tile: multiple of 16, VMEM-sized; split small C into
    # >=2 grid steps only when there is a second TensorCore to feed (v7x).
    tile_c = min(_round_up(tile_c_target, 16), _round_up(C, 16))
    if num_cores >= 2 and _round_up(C, tile_c) // tile_c < 2 and tile_c >= 32:
        tile_c = _round_up(tile_c // 2, 16)
    C_pad = _round_up(C, tile_c)

    # neighbour-group (reduction) axis: P slots per group, one group per step.
    n_groups = (K + P - 1) // P
    K_pad = n_groups * P

    # Pack x neighbour-major, P slots per packed row (lane axis = P*D).
    xt = jnp.pad(x_kcd.astype(compute_dtype),
                 ((0, K_pad - K), (0, C_pad - C), (0, 0)))
    xt = xt.reshape(n_groups, P, C_pad, D).transpose(0, 2, 1, 3)
    xt = xt.reshape(n_groups, C_pad, Dp)

    counts_p = jnp.pad(jnp.minimum(counts, K).astype(jnp.int32),
                       (0, C_pad - C)).reshape(C_pad, 1)

    grid = (C_pad // tile_c, n_groups)             # neighbour axis innermost

    out_packed = pl.pallas_call(
        functools.partial(_sa_kernel, slots_per_group=P),
        out_shape=jax.ShapeDtypeStruct((C_pad, PH), jnp.float32),
        grid=grid,
        in_specs=[
            pl.BlockSpec((1, tile_c, Dp), lambda i, k: (k, i, 0)),
            pl.BlockSpec((tile_c, 1), lambda i, k: (i, 0)),
            # constant block index -> DMA'd once, kept resident.
            pl.BlockSpec((1, PH), lambda i, k: (0, 0)),
            pl.BlockSpec((Dp, PH), lambda i, k: (0, 0)),
            pl.BlockSpec((1, PH), lambda i, k: (0, 0)),
            pl.BlockSpec((PH, PH), lambda i, k: (0, 0)),
            pl.BlockSpec((1, PH), lambda i, k: (0, 0)),
        ],
        out_specs=pl.BlockSpec((tile_c, PH), lambda i, k: (i, 0)),
        compiler_params=pltpu.CompilerParams(
            dimension_semantics=("parallel", "arbitrary"),
            vmem_limit_bytes=16 * 1024 * 1024),   # kernel uses ~1-2 MiB
    )(xt, counts_p, lane_slot, w1_blk, b1_blk, w2_blk, b2_blk)

    # Reduce the P packed slot-groups to H; zero fallback for empty centroids
    # (reference zero-inits new_h).  Tiny op, done outside the kernel to keep
    # the kernel's store lane-dense.
    m = out_packed.reshape(C_pad, P, H).max(axis=1)            # (C_pad, H)
    m = jnp.where(counts_p > 0, m, 0.0)
    return m[:C]


def pointnet_max_reference(x_kcd, counts, params):
    """Pure-JAX f32 reference with the same layout/semantics (for checking)."""
    w1, b1, w2, b2 = params
    x = x_kcd.astype(jnp.float32)
    z = jnp.maximum(jnp.einsum("kcd,dh->kch", x, w1) + b1.reshape(1, 1, -1), 0.0)
    z = jnp.einsum("kch,hg->kcg", z, w2) + b2.reshape(1, 1, -1)
    K = x.shape[0]
    valid = jnp.arange(K)[:, None] < jnp.minimum(counts, K)[None, :]   # (K, C)
    z = jnp.where(valid[..., None], z, -jnp.inf)
    m = jnp.max(z, axis=0)                                             # (C, H)
    return jnp.where(counts[:, None] > 0, m, 0.0)


# ---------------------------------------------------------------------------
# Plain-JAX glue: FPS, radius neighbour search, gather
# ---------------------------------------------------------------------------
def _fps_single(pts, n_samples):
    """Deterministic farthest point sampling starting from index 0."""
    n = pts.shape[0]

    def body(i, state):
        idxs, mind = state
        last = pts[idxs[i - 1]]
        d = jnp.sum((pts - last) ** 2, axis=-1)
        mind = jnp.minimum(mind, d)
        nxt = jnp.argmax(mind).astype(jnp.int32)
        return idxs.at[i].set(nxt), mind

    idxs = jnp.zeros((n_samples,), jnp.int32)
    mind = jnp.full((n,), jnp.inf, jnp.float32)
    idxs, _ = jax.lax.fori_loop(1, n_samples, body, (idxs, mind))
    return idxs


def set_abstraction_forward(pos, h, params, *, n_points, radius, n_neighbors):
    """pos: (B, N, 3). Returns (centroids, new_h, centroids_batch, edge)."""
    B, N, _ = pos.shape
    pos_flat = pos.reshape(-1, 3)                                  # (M, 3)
    M = pos_flat.shape[0]
    batch_indices = jnp.repeat(jnp.arange(B, dtype=jnp.int32), N)  # (M,)
    h_flat = pos_flat if h is None else h.reshape(M, -1)

    # --- farthest point sampling (per batch, deterministic) ---
    per_batch_idx = jax.vmap(
        functools.partial(_fps_single, n_samples=n_points))(pos)   # (B, n_points)
    centroids_idx = (per_batch_idx
                     + (jnp.arange(B, dtype=jnp.int32) * N)[:, None]).reshape(-1)
    centroids = pos_flat[centroids_idx]                            # (C, 3)
    centroids_batch = batch_indices[centroids_idx]                 # (C,)
    C = centroids.shape[0]

    # --- radius neighbour search: first n_neighbors in-ball points, index order
    # (same tie-breaking as torch_cluster.radius with max_num_neighbors).
    # TODO(synk): dense (C, M) distance matrix + top-k; replace with a bucketed
    # spatial search at large M before kernel tuning matters.
    d2 = jnp.sum((centroids[:, None, :] - pos_flat[None, :, :]) ** 2, axis=-1)
    in_ball = (d2 <= radius * radius) & (
        centroids_batch[:, None] == batch_indices[None, :])        # (C, M)
    ar = jnp.arange(M, dtype=jnp.int32)
    sort_key = jnp.where(in_ball, ar, M + ar)                      # valid first
    _, nbr_idx = jax.lax.top_k(-sort_key, n_neighbors)             # (C, K)
    nbr_idx = nbr_idx.astype(jnp.int32)
    counts = jnp.minimum(jnp.sum(in_ball, axis=1), n_neighbors).astype(jnp.int32)

    # padded edge_index for API parity (torch_cluster returns variable length)
    row = jnp.repeat(jnp.arange(C, dtype=jnp.int32), n_neighbors)
    edge_index = jnp.stack([row, nbr_idx.reshape(-1)])             # (2, C*K)
    edge_valid = (jnp.arange(n_neighbors)[None, :] < counts[:, None]).reshape(-1)

    # --- gather per-edge features [h_j, pos_j - pos_i], neighbour-major so the
    # kernel never has to transpose/reshape.
    # TODO(synk): fuse this gather into the kernel (scalar-prefetch nbr_idx +
    # manual DMA from HBM) to avoid materialising (K, C, F+3) in HBM at scale.
    nbr_idx_t = nbr_idx.T                                          # (K, C)
    h_nb = jnp.take(h_flat, nbr_idx_t, axis=0)                     # (K, C, F)
    pos_nb = jnp.take(pos_flat, nbr_idx_t, axis=0)                 # (K, C, 3)
    x_kcd = jnp.concatenate([h_nb, pos_nb - centroids[None, :, :]], axis=-1)

    # --- hot path in Pallas ---
    new_h = pointnet_max_pallas(x_kcd, counts, params)             # (C, H)

    return (centroids.reshape(B, -1, 3),
            new_h.reshape(B, -1, new_h.shape[-1]),
            centroids_batch,
            (edge_index, edge_valid))


# ---------------------------------------------------------------------------
def init_params(key, in_channels, out_channels):
    d = in_channels + 3
    k1, k2, k3, k4 = jax.random.split(key, 4)
    w1 = 0.1 * jax.random.normal(k1, (d, out_channels), jnp.float32)
    b1 = 0.01 * jax.random.normal(k2, (1, out_channels), jnp.float32)
    w2 = 0.1 * jax.random.normal(k3, (out_channels, out_channels), jnp.float32)
    b2 = 0.01 * jax.random.normal(k4, (1, out_channels), jnp.float32)
    return w1, b1, w2, b2


if __name__ == "__main__":
    key = jax.random.PRNGKey(0)
    k_x, k_cnt, k_pos, k_par = jax.random.split(key, 4)

    # ---- unit check: Pallas kernel vs. pure-JAX reference --------------------
    C, K, D, H = 48, 24, 6, 32
    params_u = init_params(jax.random.fold_in(k_par, 1), D - 3, H)
    x_kcd = 0.5 * jax.random.normal(k_x, (K, C, D), jnp.float32)
    counts_u = jax.random.randint(k_cnt, (C,), 0, K + 1, dtype=jnp.int32)
    out_pl = pointnet_max_pallas(x_kcd, counts_u, params_u)
    out_ref = pointnet_max_reference(x_kcd, counts_u, params_u)
    jax.block_until_ready(out_pl)
    assert out_pl.shape == (C, H)
    err = float(jnp.max(jnp.abs(out_pl - out_ref)))
    assert err < 5e-2, f"kernel mismatch, max abs err = {err}"

    # ---- full SetAbstractionLayer forward ------------------------------------
    B, N = 2, 64
    n_points, radius_r, n_neighbors = 16, 0.6, 40   # exercises group splitting + padding
    in_channels, out_channels = 3, 32

    pos = jax.random.uniform(k_pos, (B, N, 3), jnp.float32)
    params = init_params(k_par, in_channels, out_channels)

    centroids, new_h, centroids_batch, edge = set_abstraction_forward(
        pos, None, params,
        n_points=n_points, radius=radius_r, n_neighbors=n_neighbors)
    jax.block_until_ready(new_h)
    assert centroids.shape == (B, n_points, 3)
    assert new_h.shape == (B, n_points, out_channels)
    assert bool(jnp.all(jnp.isfinite(new_h)))
    print("KERNEL_OK")
</pallas_src>

<mosaic_0001>
module attributes {stable_mosaic.version = 11 : i64} {
  func.func @_sa_kernel(%arg0: i32, %arg1: i32, %arg2: memref<1x48x48xbf16, #tpu.memory_space<vmem>>, %arg3: memref<48x1xi32, #tpu.memory_space<vmem>>, %arg4: memref<1x256xi32, #tpu.memory_space<vmem>>, %arg5: memref<48x256xbf16, #tpu.memory_space<vmem>>, %arg6: memref<1x256xf32, #tpu.memory_space<vmem>>, %arg7: memref<256x256xbf16, #tpu.memory_space<vmem>>, %arg8: memref<1x256xf32, #tpu.memory_space<vmem>>, %arg9: memref<48x256xf32, #tpu.memory_space<vmem>>) attributes {dimension_semantics = [#tpu.dimension_semantics<parallel>, #tpu.dimension_semantics<arbitrary>], iteration_bounds = array<i64: 1, 3>, scalar_prefetch = 0 : i64, scratch_operands = 0 : i64, tpu.core_type = #tpu.core_type<tc>, window_params = [{transform_indices = @transform_0, window_bounds = array<i64: 1, 48, 48>}, {transform_indices = @transform_1, window_bounds = array<i64: 48, 1>}, {pipeline_mode = #tpu.pipeline_mode<synchronous>, transform_indices = @transform_2, window_bounds = array<i64: 1, 256>}, {pipeline_mode = #tpu.pipeline_mode<synchronous>, transform_indices = @transform_3, window_bounds = array<i64: 48, 256>}, {pipeline_mode = #tpu.pipeline_mode<synchronous>, transform_indices = @transform_4, window_bounds = array<i64: 1, 256>}, {pipeline_mode = #tpu.pipeline_mode<synchronous>, transform_indices = @transform_5, window_bounds = array<i64: 256, 256>}, {pipeline_mode = #tpu.pipeline_mode<synchronous>, transform_indices = @transform_6, window_bounds = array<i64: 1, 256>}, {transform_indices = @transform_7, window_bounds = array<i64: 48, 256>}]} {
    %c0_i32 = arith.constant 0 : i32
    %0 = arith.cmpi eq, %arg1, %c0_i32 : i32
    %1 = arith.extui %0 : i1 to i32
    %c0_i32_0 = arith.constant 0 : i32
    %2 = arith.cmpi ne, %1, %c0_i32_0 : i32
    scf.if %2 {
      %cst_22 = arith.constant -1.000000e+30 : f32
      %31 = vector.broadcast %cst_22 : f32 to vector<48x256xf32>
      %c0_23 = arith.constant 0 : index
      %c0_24 = arith.constant 0 : index
      %32 = vector.load %arg9[%c0_23, %c0_24] : memref<48x256xf32, #tpu.memory_space<vmem>>, vector<48x256xf32>
      tpu.vector_store %arg9[%c0_23, %c0_24], %31 {strides = array<i32>} : memref<48x256xf32, #tpu.memory_space<vmem>>, vector<48x256xf32>,
    } else {
    }
    %c0 = arith.constant 0 : index
    %c0_1 = arith.constant 0 : index
    %c0_2 = arith.constant 0 : index
    %3 = vector.load %arg2[%c0, %c0_1, %c0_2] : memref<1x48x48xbf16, #tpu.memory_space<vmem>>, vector<1x48x48xbf16>
    %4 = vector.shape_cast %3 : vector<1x48x48xbf16> to vector<48x48xbf16>
    %c0_3 = arith.constant 0 : index
    %c0_4 = arith.constant 0 : index
    %5 = vector.load %arg5[%c0_3, %c0_4] : memref<48x256xbf16, #tpu.memory_space<vmem>>, vector<48x256xbf16>
    %c0_5 = arith.constant 0 : index
    %c0_6 = arith.constant 0 : index
    %6 = vector.load %arg7[%c0_5, %c0_6] : memref<256x256xbf16, #tpu.memory_space<vmem>>, vector<256x256xbf16>
    %cst = arith.constant dense<0.000000e+00> : vector<48x256xf32>
    %7 = tpu.matmul %4, %5, %cst {dimension_numbers = #tpu.dot_dimension_numbers<[1], [0], [0], [1], [0, 0, 1, 1], [], []>} : vector<48x48xbf16>, vector<48x256xbf16>, vector<48x256xf32> -> vector<48x256xf32>
    %c0_7 = arith.constant 0 : index
    %c0_8 = arith.constant 0 : index
    %8 = vector.load %arg6[%c0_7, %c0_8] : memref<1x256xf32, #tpu.memory_space<vmem>>, vector<1x256xf32>
    %9 = vector.broadcast %8 : vector<1x256xf32> to vector<48x256xf32>
    %10 = arith.addf %7, %9 : vector<48x256xf32>
    %cst_9 = arith.constant 0.000000e+00 : f32
    %11 = vector.broadcast %cst_9 : f32 to vector<48x256xf32>
    %12 = arith.maximumf %10, %11 : vector<48x256xf32>
    %13 = arith.truncf %12 : vector<48x256xf32> to vector<48x256xbf16>
    %cst_10 = arith.constant dense<0.000000e+00> : vector<48x256xf32>
    %14 = tpu.matmul %13, %6, %cst_10 {dimension_numbers = #tpu.dot_dimension_numbers<[1], [0], [0], [1], [0, 0, 1, 1], [], []>} : vector<48x256xbf16>, vector<256x256xbf16>, vector<48x256xf32> -> vector<48x256xf32>
    %c0_11 = arith.constant 0 : index
    %c0_12 = arith.constant 0 : index
    %15 = vector.load %arg8[%c0_11, %c0_12] : memref<1x256xf32, #tpu.memory_space<vmem>>, vector<1x256xf32>
    %16 = vector.broadcast %15 : vector<1x256xf32> to vector<48x256xf32>
    %17 = arith.addf %14, %16 : vector<48x256xf32>
    %c8_i32 = arith.constant 8 : i32
    %18 = arith.muli %arg1, %c8_i32 : i32
    %c0_13 = arith.constant 0 : index
    %c0_14 = arith.constant 0 : index
    %19 = vector.load %arg4[%c0_13, %c0_14] : memref<1x256xi32, #tpu.memory_space<vmem>>, vector<1x256xi32>
    %20 = vector.broadcast %18 : i32 to vector<1x256xi32>
    %21 = arith.addi %20, %19 : vector<1x256xi32>
    %c0_15 = arith.constant 0 : index
    %c0_16 = arith.constant 0 : index
    %22 = vector.load %arg3[%c0_15, %c0_16] : memref<48x1xi32, #tpu.memory_space<vmem>>, vector<48x1xi32>
    %23 = vector.broadcast %21 : vector<1x256xi32> to vector<48x256xi32>
    %24 = vector.broadcast %22 : vector<48x1xi32> to vector<48x256xi32>
    %25 = arith.cmpi slt, %23, %24 : vector<48x256xi32>
    %c0_17 = arith.constant 0 : index
    %c0_18 = arith.constant 0 : index
    %26 = vector.load %arg9[%c0_17, %c0_18] : memref<48x256xf32, #tpu.memory_space<vmem>>, vector<48x256xf32>
    %cst_19 = arith.constant -1.000000e+30 : f32
    %27 = vector.broadcast %cst_19 : f32 to vector<48x256xf32>
    %28 = arith.select %25, %17, %27 : vector<48x256xi1>, vector<48x256xf32>
    %29 = arith.maximumf %26, %28 : vector<48x256xf32>
    %c0_20 = arith.constant 0 : index
    %c0_21 = arith.constant 0 : index
    %30 = vector.load %arg9[%c0_20, %c0_21] : memref<48x256xf32, #tpu.memory_space<vmem>>, vector<48x256xf32>
    tpu.vector_store %arg9[%c0_20, %c0_21], %29 {strides = array<i32>} : memref<48x256xf32, #tpu.memory_space<vmem>>, vector<48x256xf32>,
    return
  }
  func.func @transform_0(%arg0: i32, %arg1: i32) -> (i32, i32, i32) {
    %c0_i32 = arith.constant 0 : i32
    %c0_i32_0 = arith.constant 0 : i32
    return %arg1, %arg0, %c0_i32 : i32, i32, i32
  }
  func.func @transform_1(%arg0: i32, %arg1: i32) -> (i32, i32) {
    %c0_i32 = arith.constant 0 : i32
    %c0_i32_0 = arith.constant 0 : i32
    return %arg0, %c0_i32 : i32, i32
  }
  func.func @transform_2(%arg0: i32, %arg1: i32) -> (i32, i32) {
    %c0_i32 = arith.constant 0 : i32
    %c0_i32_0 = arith.constant 0 : i32
    %c0_i32_1 = arith.constant 0 : i32
    return %c0_i32, %c0_i32_0 : i32, i32
  }
  func.func @transform_3(%arg0: i32, %arg1: i32) -> (i32, i32) {
    %c0_i32 = arith.constant 0 : i32
    %c0_i32_0 = arith.constant 0 : i32
    %c0_i32_1 = arith.constant 0 : i32
    return %c0_i32, %c0_i32_0 : i32, i32
  }
  func.func @transform_4(%arg0: i32, %arg1: i32) -> (i32, i32) {
    %c0_i32 = arith.constant 0 : i32
    %c0_i32_0 = arith.constant 0 : i32
    %c0_i32_1 = arith.constant 0 : i32
    return %c0_i32, %c0_i32_0 : i32, i32
  }
  func.func @transform_5(%arg0: i32, %arg1: i32) -> (i32, i32) {
    %c0_i32 = arith.constant 0 : i32
    %c0_i32_0 = arith.constant 0 : i32
    %c0_i32_1 = arith.constant 0 : i32
    return %c0_i32, %c0_i32_0 : i32, i32
  }
  func.func @transform_6(%arg0: i32, %arg1: i32) -> (i32, i32) {
    %c0_i32 = arith.constant 0 : i32
    %c0_i32_0 = arith.constant 0 : i32
    %c0_i32_1 = arith.constant 0 : i32
    return %c0_i32, %c0_i32_0 : i32, i32
  }
  func.func @transform_7(%arg0: i32, %arg1: i32) -> (i32, i32) {
    %c0_i32 = arith.constant 0 : i32
    %c0_i32_0 = arith.constant 0 : i32
    return %arg0, %c0_i32 : i32, i32
  }
}

</mosaic_0001>

<llo_original>
// kernel: tpu_custom_call.1
$region0: #{tpu_custom_call.1}
  #allocation0 [shape = 'u32[]', space=smem, size = 0x4, offset = 0x4, fixed_abs, tag = 'smem constant byte address 0x4 - core index']
  #allocation1 [shape = 'u32[144,128]{1,0:T(1,128)}', space=vmem, size = 0x12000, scoped, tag = 'internal scratch']
  %s0 = inlined_call_operand.hbm [shape: bf16[3,48,48], index: 0, kind: input, shape index: {}]
  %s1 = inlined_call_operand.vmem [shape: s32[48,1], index: 1, kind: input, shape index: {}]
  %s2 = inlined_call_operand.vmem [shape: s32[1,256], index: 2, kind: input, shape index: {}]
  %s3 = inlined_call_operand.vmem [shape: bf16[48,256], index: 3, kind: input, shape index: {}]
  %s4 = inlined_call_operand.vmem [shape: f32[1,256], index: 4, kind: input, shape index: {}]
  %s5 = inlined_call_operand.hbm [shape: bf16[256,256], index: 5, kind: input, shape index: {}]
  %s6 = inlined_call_operand.vmem [shape: f32[1,256], index: 6, kind: input, shape index: {}]
  %s7 = inlined_call_operand.hbm [shape: f32[48,256], index: 7, kind: output, shape index: {}]
  %s8 = sld [smem:[#allocation0]]
  $region73: #{tpu_custom_call.1} parent=0
    _
  %s10 = ssub.s32 1, %s8
  %s11 = scalar_select 0, %s10, %s8
  $region1: #{tpu_custom_call.1} parent=0
    #allocation2 [shape = 'u8[24576]{0}', space=vmem, size = 0x6000, scoped, tag = 'input window, operand 0']
    #allocation3 [shape = 's32[2]{0}', space=sflag, size = 0x8, scoped, tag = 'scoped memory for tpu_custom_call.1']
    #allocation4 [shape = 's32[2]{0}', space=sflag, size = 0x8, scoped, tag = 'scoped memory for tpu_custom_call.1']
    #allocation5 [shape = 'u8[131072]{0}', space=vmem, size = 0x20000, scoped, tag = 'input window, operand 5, single buffered']
    #allocation6 [shape = 's32[1]{0}', space=sflag, size = 0x4, scoped, tag = 'scoped memory for tpu_custom_call.1']
    #allocation7 [shape = 'u8[49152]{0}', space=vmem, size = 0xc000, scoped, tag = 'output window, operand 0, single buffered']
    %12 = vsyncpa [#allocation3], 0
    %s13 = scalar_lea.sflag [#allocation3], 1
    %14 = vsyncpa %s13, 0
    %15 = vsyncpa [#allocation6], 0
    %16 = vsyncpa [#allocation4], 0
    loop: start=0, step=1, limit=5
    $region2: #{tpu_custom_call.1} parent=1 // loop_pre_header
      _
    $region3: #{tpu_custom_call.1} parent=1 // loop_header
      %s18 = sphi 0, %s22
      %p19 = scmp.ge.s32.totalorder %s18, 5
      %s25 = sphi 0, %s37
      %s26 = sphi 0, %s33
      %s27 = sphi 0, %s25
      %s28 = sphi 0, %s26
      %s29 = sphi 0, %s27
      %s30 = sphi 0, %s28
      %s42 = sphi 0, %s44
      %s45 = sphi 0, %s42
      %s46 = sphi 0, %s45
      %s62 = sphi 0, %s46
      %s68 = sphi 0, %s70
      %s71 = sphi 0, %s68
      %s72 = sphi 0, %s71
      %s88 = sphi 0, %s72
      %s92 = sphi 0, %s92
      %s94 = sphi 0, %s92
      %s95 = sphi 0, %s94
      %s109 = sphi 0, %s95
      %s113 = sphi 0, %s113
      %s115 = sphi 0, %s113
      %s116 = sphi 0, %s115
      %s130 = sphi 0, %s116
      %s134 = sphi 0, %s134
      %s136 = sphi 0, %s134
      %s137 = sphi 0, %s136
      %s151 = sphi 0, %s137
      %s155 = sphi 0, %s155
      %s157 = sphi 0, %s155
      %s158 = sphi 0, %s157
      %s172 = sphi 0, %s158
      %s176 = sphi 0, %s176
      %s178 = sphi 0, %s176
      %s179 = sphi 0, %s178
      %s193 = sphi 0, %s179
      %s199 = sphi 0, %s201
      %s202 = sphi 0, %s199
      %s203 = sphi 0, %s202
      %s219 = sphi 0, %s203
    $region4: #{tpu_custom_call.1} parent=1 // loop_header_branch
      %21 = sbr.rel (%p19) target = $region8
    $region5: #{tpu_custom_call.1} parent=1 // loop_body
      %s23 = ssub.s32 %s18, 1
      %s24 = ssub.s32 %s18, 2
      %s31 = sadd.s32 1, %s26
      %p32 = scmp.ge.s32.totalorder %s31, 3
      %s33 = scalar_select %p32, 0, %s31
      %s34 = sadd.s32 1, %s25
      %s35 = scalar_select %p32, %s34, %s25
      %p36 = scmp.ge.s32.totalorder %s35, 1
      %s37 = scalar_select %p36, 0, %s35
      %s38 = ssub.s32 %s26, %s33
      %s39 = ssub.s32 %s25, %s37
      %s40 = sor.u32 %s38, %s39
      %p41 = scmp.eq.s32.totalorder %s40, 0
      %s43 = sadd.s32 %s42, 1
      %s44 = scalar_select %p41, %s42, %s43
      %p47 = pneg %p41
      %p48 = scmp.eq.s32.totalorder %s18, 2
      %p49 = por %p47, %p48
      %p50 = scmp.ne.s32.totalorder %s42, %s45
      %p51 = scmp.eq.s32.totalorder %s18, 0
      %p52 = por %p50, %p51
      %p53 = scmp.ne.s32.totalorder %s42, %s45
      %p54 = scmp.eq.s32.totalorder %s23, 2
      %p55 = por %p53, %p54
      %p56 = scmp.ne.s32.totalorder %s45, %s46
      %p57 = scmp.eq.s32.totalorder %s23, 0
      %p58 = por %p56, %p57
      %p59 = scmp.ne.s32.totalorder %s45, %s46
      %p60 = scmp.eq.s32.totalorder %s24, 2
      %p61 = por %p59, %p60
      %p63 = scmp.ne.s32.totalorder %s46, %s62
      %p64 = scmp.eq.s32.totalorder %s24, 0
      %p65 = por %p63, %p64
      %s66 = ssub.s32 %s25, %s37
      %p67 = scmp.eq.s32.totalorder %s66, 0
      %s69 = sadd.s32 %s68, 1
      %s70 = scalar_select %p67, %s68, %s69
      %p73 = pneg %p67
      %p74 = scmp.eq.s32.totalorder %s18, 2
      %p75 = por %p73, %p74
      %p76 = scmp.ne.s32.totalorder %s68, %s71
      %p77 = scmp.eq.s32.totalorder %s18, 0
      %p78 = por %p76, %p77
      %p79 = scmp.ne.s32.totalorder %s68, %s71
      %p80 = scmp.eq.s32.totalorder %s23, 2
      %p81 = por %p79, %p80
      %p82 = scmp.ne.s32.totalorder %s71, %s72
      %p83 = scmp.eq.s32.totalorder %s23, 0
      %p84 = por %p82, %p83
      %p85 = scmp.ne.s32.totalorder %s71, %s72
      %p86 = scmp.eq.s32.totalorder %s24, 2
      %p87 = por %p85, %p86
      %p89 = scmp.ne.s32.totalorder %s72, %s88
      %p90 = scmp.eq.s32.totalorder %s24, 0
      %p91 = por %p89, %p90
      %s93 = sadd.s32 %s92, 1
      %p96 = scmp.eq.s32.totalorder %s18, 2
      %p97 = scmp.ne.s32.totalorder %s92, %s94
      %p98 = scmp.eq.s32.totalorder %s18, 0
      %p99 = por %p97, %p98
      %p100 = scmp.ne.s32.totalorder %s92, %s94
      %p101 = scmp.eq.s32.totalorder %s23, 2
      %p102 = por %p100, %p101
      %p103 = scmp.ne.s32.totalorder %s94, %s95
      %p104 = scmp.eq.s32.totalorder %s23, 0
      %p105 = por %p103, %p104
      %p106 = scmp.ne.s32.totalorder %s94, %s95
      %p107 = scmp.eq.s32.totalorder %s24, 2
      %p108 = por %p106, %p107
      %p110 = scmp.ne.s32.totalorder %s95, %s109
      %p111 = scmp.eq.s32.totalorder %s24, 0
      %p112 = por %p110, %p111
      %s114 = sadd.s32 %s113, 1
      %p117 = scmp.eq.s32.totalorder %s18, 2
      %p118 = scmp.ne.s32.totalorder %s113, %s115
      %p119 = scmp.eq.s32.totalorder %s18, 0
      %p120 = por %p118, %p119
      %p121 = scmp.ne.s32.totalorder %s113, %s115
      %p122 = scmp.eq.s32.totalorder %s23, 2
      %p123 = por %p121, %p122
      %p124 = scmp.ne.s32.totalorder %s115, %s116
      %p125 = scmp.eq.s32.totalorder %s23, 0
      %p126 = por %p124, %p125
      %p127 = scmp.ne.s32.totalorder %s115, %s116
      %p128 = scmp.eq.s32.totalorder %s24, 2
      %p129 = por %p127, %p128
      %p131 = scmp.ne.s32.totalorder %s116, %s130
      %p132 = scmp.eq.s32.totalorder %s24, 0
      %p133 = por %p131, %p132
      %s135 = sadd.s32 %s134, 1
      %p138 = scmp.eq.s32.totalorder %s18, 2
      %p139 = scmp.ne.s32.totalorder %s134, %s136
      %p140 = scmp.eq.s32.totalorder %s18, 0
      %p141 = por %p139, %p140
      %p142 = scmp.ne.s32.totalorder %s134, %s136
      %p143 = scmp.eq.s32.totalorder %s23, 2
      %p144 = por %p142, %p143
      %p145 = scmp.ne.s32.totalorder %s136, %s137
      %p146 = scmp.eq.s32.totalorder %s23, 0
      %p147 = por %p145, %p146
      %p148 = scmp.ne.s32.totalorder %s136, %s137
      %p149 = scmp.eq.s32.totalorder %s24, 2
      %p150 = por %p148, %p149
      %p152 = scmp.ne.s32.totalorder %s137, %s151
      %p153 = scmp.eq.s32.totalorder %s24, 0
      %p154 = por %p152, %p153
      %s156 = sadd.s32 %s155, 1
      %p159 = scmp.eq.s32.totalorder %s18, 2
      %p160 = scmp.ne.s32.totalorder %s155, %s157
      %p161 = scmp.eq.s32.totalorder %s18, 0
      %p162 = por %p160, %p161
      %p163 = scmp.ne.s32.totalorder %s155, %s157
      %p164 = scmp.eq.s32.totalorder %s23, 2
      %p165 = por %p163, %p164
      %p166 = scmp.ne.s32.totalorder %s157, %s158
      %p167 = scmp.eq.s32.totalorder %s23, 0
      %p168 = por %p166, %p167
      %p169 = scmp.ne.s32.totalorder %s157, %s158
      %p170 = scmp.eq.s32.totalorder %s24, 2
      %p171 = por %p169, %p170
      %p173 = scmp.ne.s32.totalorder %s158, %s172
      %p174 = scmp.eq.s32.totalorder %s24, 0
      %p175 = por %p173, %p174
      %s177 = sadd.s32 %s176, 1
      %p180 = scmp.eq.s32.totalorder %s18, 2
      %p181 = scmp.ne.s32.totalorder %s176, %s178
      %p182 = scmp.eq.s32.totalorder %s18, 0
      %p183 = por %p181, %p182
      %p184 = scmp.ne.s32.totalorder %s176, %s178
      %p185 = scmp.eq.s32.totalorder %s23, 2
      %p186 = por %p184, %p185
      %p187 = scmp.ne.s32.totalorder %s178, %s179
      %p188 = scmp.eq.s32.totalorder %s23, 0
      %p189 = por %p187, %p188
      %p190 = scmp.ne.s32.totalorder %s178, %s179
      %p191 = scmp.eq.s32.totalorder %s24, 2
      %p192 = por %p190, %p191
      %p194 = scmp.ne.s32.totalorder %s179, %s193
      %p195 = scmp.eq.s32.totalorder %s24, 0
      %p196 = por %p194, %p195
      %s197 = ssub.s32 %s25, %s37
      %p198 = scmp.eq.s32.totalorder %s197, 0
      %s200 = sadd.s32 %s199, 1
      %s201 = scalar_select %p198, %s199, %s200
      %p204 = pneg %p198
      %p205 = scmp.eq.s32.totalorder %s18, 2
      %p206 = por %p204, %p205
      %p207 = scmp.ne.s32.totalorder %s199, %s202
      %p208 = scmp.eq.s32.totalorder %s18, 0
      %p209 = por %p207, %p208
      %p210 = scmp.ne.s32.totalorder %s199, %s202
      %p211 = scmp.eq.s32.totalorder %s23, 2
      %p212 = por %p210, %p211
      %p213 = scmp.ne.s32.totalorder %s202, %s203
      %p214 = scmp.eq.s32.totalorder %s23, 0
      %p215 = por %p213, %p214
      %p216 = scmp.ne.s32.totalorder %s202, %s203
      %p217 = scmp.eq.s32.totalorder %s24, 2
      %p218 = por %p216, %p217
      %p220 = scmp.ne.s32.totalorder %s203, %s219
      %p221 = scmp.eq.s32.totalorder %s24, 0
      %p222 = por %p220, %p221
      %p223 = scmp.le.s32.totalorder 1, %s18
      %p224 = scmp.lt.s32.totalorder %s18, 4
      %p225 = pnand %p223, %p224
      %p226 = pneg %p225
      // Predicated region
      $region9: #{tpu_custom_call.1} parent=5 // pred_check
        _
      $region10: #{tpu_custom_call.1} parent=5 // pred_check_branch
        %228 = sbr.rel (%p225) target = $region12
      $region11: #{tpu_custom_call.1} parent=5 // pred_region
        %s229 = ssub.s32 %s18, 1
        // Predicated region
        $region13: #{tpu_custom_call.1} parent=11 // pred_check
          %p230 = pneg %p84
        $region14: #{tpu_custom_call.1} parent=11 // pred_check_branch
          %232 = sbr.rel (%p230) target = $region16
        $region15: #{tpu_custom_call.1} parent=11 // pred_region
          %s233 = smul.u32 6, %s27
          %p234 = scmp.lt.s32.totalorder %s233, 5
          %s235 = scalar_select %p234, %s233, 5
          %s236 = smul.addr %s235, 8
          %s237 = scalar_lea.vmem %s1, %s236
          %s238 = smul.u32 6, %s27
        $region16: #{tpu_custom_call.1} parent=11 // pred_fallthru
          _
        // Predicated region
        $region17: #{tpu_custom_call.1} parent=11 // pred_check
          %p239 = pneg %p105
        $region18: #{tpu_custom_call.1} parent=11 // pred_check_branch
          %241 = sbr.rel (%p239) target = $region20
        $region19: #{tpu_custom_call.1} parent=11 // pred_region
          _
        $region20: #{tpu_custom_call.1} parent=11 // pred_fallthru
          _
        // Predicated region
        $region21: #{tpu_custom_call.1} parent=11 // pred_check
          %p242 = pneg %p126
        $region22: #{tpu_custom_call.1} parent=11 // pred_check_branch
          %244 = sbr.rel (%p242) target = $region24
        $region23: #{tpu_custom_call.1} parent=11 // pred_region
          _
        $region24: #{tpu_custom_call.1} parent=11 // pred_fallthru
          _
        // Predicated region
        $region25: #{tpu_custom_call.1} parent=11 // pred_check
          %p245 = pneg %p147
        $region26: #{tpu_custom_call.1} parent=11 // pred_check_branch
          %247 = sbr.rel (%p245) target = $region28
        $region27: #{tpu_custom_call.1} parent=11 // pred_region
          _
        $region28: #{tpu_custom_call.1} parent=11 // pred_fallthru
          _
        // Predicated region
        $region29: #{tpu_custom_call.1} parent=11 // pred_check
          %p248 = pneg %p168
        $region30: #{tpu_custom_call.1} parent=11 // pred_check_branch
          %250 = sbr.rel (%p248) target = $region32
        $region31: #{tpu_custom_call.1} parent=11 // pred_region
          %s252 = ssub.s32 4096, 4096
          %253 = vsyncadd [#allocation6], %s252
          %s254 = sshll.u32 [#allocation5], 4
          %s255 = int_to_ptr.vmem [resolvable:$true] %s254
          %260 = dma.hbm_to_vmem [thread:$0]  %s5, 4096, %s255, [#allocation6], 128, 128, 8
        $region32: #{tpu_custom_call.1} parent=11 // pred_fallthru
          _
        // Predicated region
        $region33: #{tpu_custom_call.1} parent=11 // pred_check
          %p261 = pneg %p189
        $region34: #{tpu_custom_call.1} parent=11 // pred_check_branch
          %263 = sbr.rel (%p261) target = $region36
        $region35: #{tpu_custom_call.1} parent=11 // pred_region
          _
        $region36: #{tpu_custom_call.1} parent=11 // pred_fallthru
          _
      $region12: #{tpu_custom_call.1} parent=5 // pred_fallthru
        _
      %p264 = scmp.lt.s32.totalorder %s18, 3
      // Predicated region
      $region37: #{tpu_custom_call.1} parent=5 // pred_check
        %p265 = pneg %p264
      $region38: #{tpu_custom_call.1} parent=5 // pred_check_branch
        %267 = sbr.rel (%p265) target = $region40
      $region39: #{tpu_custom_call.1} parent=5 // pred_region
        // Predicated region
        $region41: #{tpu_custom_call.1} parent=39 // pred_check
          %p268 = pneg %p52
        $region42: #{tpu_custom_call.1} parent=39 // pred_check_branch
          %270 = sbr.rel (%p268) target = $region44
        $region43: #{tpu_custom_call.1} parent=39 // pred_region
          %s271 = sand.u32 %s42, 1
          %s272 = scalar_lea.sflag [#allocation3], %s271
          %s273 = sand.u32 %s42, 1
          %s274 = smul.addr %s273, 24
          %s275 = scalar_lea.vmem [#allocation2], %s274
          %s276 = smul.u32 6, %s25
          %s278 = ssub.s32 384, 384
          %279 = vsyncadd %s272, %s278
          %s280 = smul.addr %s26, 6
          %s281 = sadd.s32 %s276, %s280
          %s282 = smul.addr %s281, 64
          %s283 = scalar_lea.hbm %s0, %s282
          %s284 = sshll.u32 %s275, 4
          %s285 = int_to_ptr.vmem [resolvable:$true] %s284
          %290 = dma.hbm_to_vmem [thread:$0]  %s283, 384, %s285, %s272, 64, 64, 4
        $region44: #{tpu_custom_call.1} parent=39 // pred_fallthru
          _
      $region40: #{tpu_custom_call.1} parent=5 // pred_fallthru
        _
      %p291 = scmp.le.s32.totalorder 1, %s18
      %p292 = scmp.lt.s32.totalorder %s18, 4
      %p293 = pnand %p291, %p292
      %p294 = pneg %p293
      // Predicated region
      $region45: #{tpu_custom_call.1} parent=5 // pred_check
        _
      $region46: #{tpu_custom_call.1} parent=5 // pred_check_branch
        %296 = sbr.rel (%p293) target = $region48
      $region47: #{tpu_custom_call.1} parent=5 // pred_region
        %s297 = ssub.s32 %s18, 1
        %s298 = sand.u32 %s45, 1
        %s299 = scalar_lea.sflag [#allocation3], %s298
        %s300 = sand.u32 %s45, 1
        %s301 = smul.addr %s300, 24
        %s302 = scalar_lea.vmem [#allocation2], %s301
        // Predicated region
        $region49: #{tpu_custom_call.1} parent=47 // pred_check
          %p303 = pneg %p58
        $region50: #{tpu_custom_call.1} parent=47 // pred_check_branch
          %305 = sbr.rel (%p303) target = $region52
        $region51: #{tpu_custom_call.1} parent=47 // pred_region
          %306 = dma.done %s299, 384
        $region52: #{tpu_custom_call.1} parent=47 // pred_fallthru
          _
        // Predicated region
        $region53: #{tpu_custom_call.1} parent=47 // pred_check
          %p307 = pneg %p168
        $region54: #{tpu_custom_call.1} parent=47 // pred_check_branch
          %309 = sbr.rel (%p307) target = $region56
        $region55: #{tpu_custom_call.1} parent=47 // pred_region
          %310 = dma.done [#allocation6], 4096
        $region56: #{tpu_custom_call.1} parent=47 // pred_fallthru
          _
        %s311 = sand.u32 %s45, 1
        %s312 = scalar_lea.sflag [#allocation3], %s311
        %s313 = sand.u32 %s45, 1
        %s314 = smul.addr %s313, 24
        %s315 = scalar_lea.vmem [#allocation2], %s314
        %p316 = pneg %p58
        %p317 = pneg %p55
        %s318 = smul.u32 6, %s27
        %p319 = scmp.lt.s32.totalorder %s318, 5
        %s320 = scalar_select %p319, %s318, 5
        %s321 = smul.addr %s320, 8
        %s322 = scalar_lea.vmem %s1, %s321
        %p323 = pneg %p84
        %p324 = pneg %p81
        %p325 = pneg %p105
        %p326 = pneg %p102
        %p327 = pneg %p126
        %p328 = pneg %p123
        %p329 = pneg %p147
        %p330 = pneg %p144
        %p331 = pneg %p168
        %p332 = pneg %p165
        %p333 = pneg %p189
        %p334 = pneg %p186
        %p335 = pneg %p215
        %p336 = pneg %p212
        %s337 = smul.u32 6, %s27
        %s338 = smul.u32 6, %s27
        %p339 = scmp.lt.s32.totalorder %s338, 5
        %s340 = scalar_select %p339, %s338, 5
        %s341 = smul.addr %s340, 8
        %s342 = scalar_lea.vmem %s1, %s341
        %s343 = smul.u32 6, %s27
        %s344 = smul.u32 6, %s27
        %p346 = scmp.eq.s32.totalorder %s28, 0
        // Predicated region
        $region57: #{tpu_custom_call.1} parent=47 // pred_check
          %p347 = pneg %p346
        $region58: #{tpu_custom_call.1} parent=47 // pred_check_branch
          %349 = sbr.rel (%p347) target = $region60
        $region59: #{tpu_custom_call.1} parent=47 // pred_region
          %350 = vst [vmem:[#allocation7] sm:$0xff] -1e+30
          %351 = vst [vmem:[#allocation7 + $0x8] sm:$0xff] -1e+30
          %352 = vst [vmem:[#allocation7 + $0x10] sm:$0xff] -1e+30
          %353 = vst [vmem:[#allocation7 + $0x18] sm:$0xff] -1e+30
          %354 = vst [vmem:[#allocation7 + $0x20] sm:$0xff] -1e+30
          %355 = vst [vmem:[#allocation7 + $0x28] sm:$0xff] -1e+30
          %356 = vst [vmem:[#allocation7 + $0x30] sm:$0xff] -1e+30
          %357 = vst [vmem:[#allocation7 + $0x38] sm:$0xff] -1e+30
          %358 = vst [vmem:[#allocation7 + $0x40] sm:$0xff] -1e+30
          %359 = vst [vmem:[#allocation7 + $0x48] sm:$0xff] -1e+30
          %360 = vst [vmem:[#allocation7 + $0x50] sm:$0xff] -1e+30
          %361 = vst [vmem:[#allocation7 + $0x58] sm:$0xff] -1e+30
        $region60: #{tpu_custom_call.1} parent=47 // pred_fallthru
          _
        %v362 = vld [vmem:[%s302] sm:$0xf]
        %v363 = vld [vmem:[%s302 + $0x4] sm:$0xf]
        %v364 = vld [vmem:[%s302 + $0x8] sm:$0xf]
        %v365 = vld [vmem:[%s302 + $0xc] sm:$0xf]
        %v366 = vld [vmem:[%s302 + $0x10] sm:$0xf]
        %v367 = vld [vmem:[%s302 + $0x14] sm:$0xf]
        %v368 = vld [vmem:[%s3] sm:$0xff]
        %v369 = vld [vmem:[%s3 + $0x8] sm:$0xff]
        %v370 = vld [vmem:[%s3 + $0x10] sm:$0xff]
        %v371 = vld [vmem:[%s3 + $0x18] sm:$0xff]
        %v372 = vld [vmem:[%s3 + $0x20] sm:$0xff]
        %v373 = vld [vmem:[%s3 + $0x28] sm:$0xff]
        %v374 = vld [vmem:[#allocation5] sm:$0xff]
        %v375 = vld [vmem:[#allocation5 + $0x8] sm:$0xff]
        %v376 = vld [vmem:[#allocation5 + $0x10] sm:$0xff]
        %v377 = vld [vmem:[#allocation5 + $0x18] sm:$0xff]
        %v378 = vld [vmem:[#allocation5 + $0x20] sm:$0xff]
        %v379 = vld [vmem:[#allocation5 + $0x28] sm:$0xff]
        %v380 = vld [vmem:[#allocation5 + $0x30] sm:$0xff]
        %v381 = vld [vmem:[#allocation5 + $0x38] sm:$0xff]
        %v382 = vld [vmem:[#allocation5 + $0x40] sm:$0xff]
        %v383 = vld [vmem:[#allocation5 + $0x48] sm:$0xff]
        %v384 = vld [vmem:[#allocation5 + $0x50] sm:$0xff]
        %v385 = vld [vmem:[#allocation5 + $0x58] sm:$0xff]
        %v386 = vld [vmem:[#allocation5 + $0x60] sm:$0xff]
        %v387 = vld [vmem:[#allocation5 + $0x68] sm:$0xff]
        %v388 = vld [vmem:[#allocation5 + $0x70] sm:$0xff]
        %v389 = vld [vmem:[#allocation5 + $0x78] sm:$0xff]
        %v390 = vld [vmem:[#allocation5 + $0x80] sm:$0xff]
        %v391 = vld [vmem:[#allocation5 + $0x88] sm:$0xff]
        %v392 = vld [vmem:[#allocation5 + $0x90] sm:$0xff]
        %v393 = vld [vmem:[#allocation5 + $0x98] sm:$0xff]
        %v394 = vld [vmem:[#allocation5 + $0xa0] sm:$0xff]
        %v395 = vld [vmem:[#allocation5 + $0xa8] sm:$0xff]
        %v396 = vld [vmem:[#allocation5 + $0xb0] sm:$0xff]
        %v397 = vld [vmem:[#allocation5 + $0xb8] sm:$0xff]
        %v398 = vld [vmem:[#allocation5 + $0xc0] sm:$0xff]
        %v399 = vld [vmem:[#allocation5 + $0xc8] sm:$0xff]
        %v400 = vld [vmem:[#allocation5 + $0xd0] sm:$0xff]
        %v401 = vld [vmem:[#allocation5 + $0xd8] sm:$0xff]
        %v402 = vld [vmem:[#allocation5 + $0xe0] sm:$0xff]
        %v403 = vld [vmem:[#allocation5 + $0xe8] sm:$0xff]
        %v404 = vld [vmem:[#allocation5 + $0xf0] sm:$0xff]
        %v405 = vld [vmem:[#allocation5 + $0xf8] sm:$0xff]
        %v406 = vld [vmem:[%s4] sm:$0x3]
        %v408 = vlaneseq
        %v409 = vshrl.u32 %v408, 7
        %v410 = vsub.s32 0, %v409
        %v411 = vrot.slane %v406, %v410
        %v412 = vlaneseq
        %v413 = vshrl.u32 %v412, 7
        %v414 = vsub.s32 1, %v413
        %v415 = vrot.slane %v406, %v414
        %v424 = vunpack.c.l.b16 %v362
        %v425 = vunpack.c.l.b16 %v363
        %v426 = vunpack.c.l.b16 %v364
        %v427 = vunpack.c.l.b16 %v365
        %v428 = vunpack.c.l.b16 %v366
        %v429 = vunpack.c.l.b16 %v367
        %v430 = vpack.c.b16 %v425, %v424
        %v431 = vpack.c.b16 %v427, %v426
        %v432 = vpack.c.b16 %v429, %v428
        %v439 = vunpack.c.l.b16 %v368
        %v440 = vunpack.c.h.b16 %v368
        %v441 = vunpack.c.l.b16 %v369
        %v442 = vunpack.c.h.b16 %v369
        %v443 = vunpack.c.l.b16 %v370
        %v444 = vunpack.c.h.b16 %v370
        %v445 = vunpack.c.l.b16 %v371
        %v446 = vunpack.c.h.b16 %v371
        %v447 = vunpack.c.l.b16 %v372
        %v448 = vunpack.c.h.b16 %v372
        %v449 = vunpack.c.l.b16 %v373
        %v450 = vunpack.c.h.b16 %v373
        %v451 = vpack.c.b16 %v441, %v439
        %v452 = vpack.c.b16 %v442, %v440
        %v453 = vpack.c.b16 %v445, %v443
        %v454 = vpack.c.b16 %v446, %v444
        %v455 = vpack.c.b16 %v449, %v447
        %v456 = vpack.c.b16 %v450, %v448
        %vm463 = vcmask 392192
        %v465 = vsel %vm463, %v430, 0
        %v468 = vsel %vm463, %v431, 0
        %v471 = vsel %vm463, %v432, 0
        %473 = vmatprep.subr.bf16.mxu0 %v452
        %474 = vmatpush1.bf16.msra.mxu0 %v451
        %475 = vmatprep.subr.bf16.mxu0 %v454
        %476 = vmatpush1.bf16.msra.mxu0 %v453
        %477 = vmatprep.subr.bf16.mxu0 %v456
        %478 = vmatpush1.bf16.msra.mxu0 %v455
        %479 = vmatprep.subr.bf16.mxu0 0
        %480 = vmatpush1.bf16.msra.mxu0 0
        %481 = vmatprep.subr.bf16.mxu0 0
        %482 = vmatpush1.bf16.msra.mxu0 0
        %483 = vmatprep.subr.bf16.mxu0 0
        %484 = vmatpush1.bf16.msra.mxu0 0
        %485 = vmatprep.subr.bf16.mxu0 0
        %486 = vmatpush1.bf16.msra.mxu0 0
        %487 = vmatprep.subr.bf16.mxu0 0
        %488 = vmatpush1.bf16.msra.mxu0 0
        %489 = vmatprep.subr.bf16.mxu0 0
        %490 = vmatpush1.bf16.msra.mxu0 0
        %491 = vmatprep.subr.bf16.mxu0 0
        %492 = vmatpush1.bf16.msra.mxu0 0
        %493 = vmatprep.subr.bf16.mxu0 0
        %494 = vmatpush1.bf16.msra.mxu0 0
        %495 = vmatprep.subr.bf16.mxu0 0
        %496 = vmatpush1.bf16.msra.mxu0 0
        %497 = vmatprep.subr.bf16.mxu0 0
        %498 = vmatpush1.bf16.msra.mxu0 0
        %499 = vmatprep.subr.bf16.mxu0 0
        %500 = vmatpush1.bf16.msra.mxu0 0
        %501 = vmatprep.subr.bf16.mxu0 0
        %502 = vmatpush1.bf16.msra.mxu0 0
        %503 = vmatprep.subr.bf16.mxu0 0
        %504 = vmatpush1.bf16.msra.mxu0 0
        %505 = vmatprep.mubr.bf16.mxu0 0
        %506 = vmatmul.mubr.bf16.gmra.mrb[0].mxu0 %v465
        %v507 = vpop.f32.mrb[0].mxu0
        %v508 = vadd.f32 %v411, %v507
        %v509 = vpop.f32.mrb[0].mxu0
        %v510 = vadd.f32 %v415, %v509
        %v511 = vpop.f32.mrb[0].mxu0
        %v512 = vadd.f32 %v411, %v511
        %v513 = vpop.f32.mrb[0].mxu0
        %v514 = vadd.f32 %v415, %v513
        %515 = vmatprep.mubr.bf16.mxu0 0
        %516 = vmatmul.mubr.bf16.gmra.mrb[0].mxu0 %v468
        %v517 = vpop.f32.mrb[0].mxu0
        %v518 = vadd.f32 %v411, %v517
        %v519 = vpop.f32.mrb[0].mxu0
        %v520 = vadd.f32 %v415, %v519
        %v521 = vpop.f32.mrb[0].mxu0
        %v522 = vadd.f32 %v411, %v521
        %v523 = vpop.f32.mrb[0].mxu0
        %v524 = vadd.f32 %v415, %v523
        %525 = vmatprep.mubr.bf16.mxu0 0
        %526 = vmatmul.mubr.bf16.gmra.mrb[0].mxu0 %v471
        %v527 = vpop.f32.mrb[0].mxu0
        %v528 = vadd.f32 %v411, %v527
        %v529 = vpop.f32.mrb[0].mxu0
        %v530 = vadd.f32 %v415, %v529
        %v531 = vpop.f32.mrb[0].mxu0
        %v532 = vadd.f32 %v411, %v531
        %v533 = vpop.f32.mrb[0].mxu0
        %v534 = vadd.f32 %v415, %v533
        %535 = vdwg.mxu0
        %v536 = vmax.f32 %v508, 0.0
        %v537 = vmax.f32 %v510, 0.0
        %v538 = vmax.f32 %v512, 0.0
        %v539 = vmax.f32 %v514, 0.0
        %v540 = vmax.f32 %v518, 0.0
        %v541 = vmax.f32 %v520, 0.0
        %v542 = vmax.f32 %v522, 0.0
        %v543 = vmax.f32 %v524, 0.0
        %v544 = vmax.f32 %v528, 0.0
        %v545 = vmax.f32 %v530, 0.0
        %v546 = vmax.f32 %v532, 0.0
        %v547 = vmax.f32 %v534, 0.0
        %v548 = vpack.c.bf16 %v538, %v536
        %v549 = vpack.c.bf16 %v539, %v537
        %v550 = vpack.c.bf16 %v542, %v540
        %v551 = vpack.c.bf16 %v543, %v541
        %v552 = vpack.c.bf16 %v546, %v544
        %v553 = vpack.c.bf16 %v547, %v545
        %v554 = vld [vmem:[%s6] sm:$0x3]
        %v556 = vlaneseq
        %v557 = vshrl.u32 %v556, 7
        %v558 = vsub.s32 0, %v557
        %v559 = vrot.slane %v554, %v558
        %v560 = vlaneseq
        %v561 = vshrl.u32 %v560, 7
        %v562 = vsub.s32 1, %v561
        %v563 = vrot.slane %v554, %v562
        %v598 = vunpack.c.l.b16 %v374
        %v599 = vunpack.c.h.b16 %v374
        %v600 = vunpack.c.l.b16 %v375
        %v601 = vunpack.c.h.b16 %v375
        %v602 = vunpack.c.l.b16 %v376
        %v603 = vunpack.c.h.b16 %v376
        %v604 = vunpack.c.l.b16 %v377
        %v605 = vunpack.c.h.b16 %v377
        %v606 = vunpack.c.l.b16 %v378
        %v607 = vunpack.c.h.b16 %v378
        %v608 = vunpack.c.l.b16 %v379
        %v609 = vunpack.c.h.b16 %v379
        %v610 = vunpack.c.l.b16 %v380
        %v611 = vunpack.c.h.b16 %v380
        %v612 = vunpack.c.l.b16 %v381
        %v613 = vunpack.c.h.b16 %v381
        %v614 = vunpack.c.l.b16 %v382
        %v615 = vunpack.c.h.b16 %v382
        %v616 = vunpack.c.l.b16 %v383
        %v617 = vunpack.c.h.b16 %v383
        %v618 = vunpack.c.l.b16 %v384
        %v619 = vunpack.c.h.b16 %v384
        %v620 = vunpack.c.l.b16 %v385
        %v621 = vunpack.c.h.b16 %v385
        %v622 = vunpack.c.l.b16 %v386
        %v623 = vunpack.c.h.b16 %v386
        %v624 = vunpack.c.l.b16 %v387
        %v625 = vunpack.c.h.b16 %v387
        %v626 = vunpack.c.l.b16 %v388
        %v627 = vunpack.c.h.b16 %v388
        %v628 = vunpack.c.l.b16 %v389
        %v629 = vunpack.c.h.b16 %v389
        %v630 = vunpack.c.l.b16 %v390
        %v631 = vunpack.c.h.b16 %v390
        %v632 = vunpack.c.l.b16 %v391
        %v633 = vunpack.c.h.b16 %v391
        %v634 = vunpack.c.l.b16 %v392
        %v635 = vunpack.c.h.b16 %v392
        %v636 = vunpack.c.l.b16 %v393
        %v637 = vunpack.c.h.b16 %v393
        %v638 = vunpack.c.l.b16 %v394
        %v639 = vunpack.c.h.b16 %v394
        %v640 = vunpack.c.l.b16 %v395
        %v641 = vunpack.c.h.b16 %v395
        %v642 = vunpack.c.l.b16 %v396
        %v643 = vunpack.c.h.b16 %v396
        %v644 = vunpack.c.l.b16 %v397
        %v645 = vunpack.c.h.b16 %v397
        %v646 = vunpack.c.l.b16 %v398
        %v647 = vunpack.c.h.b16 %v398
        %v648 = vunpack.c.l.b16 %v399
        %v649 = vunpack.c.h.b16 %v399
        %v650 = vunpack.c.l.b16 %v400
        %v651 = vunpack.c.h.b16 %v400
        %v652 = vunpack.c.l.b16 %v401
        %v653 = vunpack.c.h.b16 %v401
        %v654 = vunpack.c.l.b16 %v402
        %v655 = vunpack.c.h.b16 %v402
        %v656 = vunpack.c.l.b16 %v403
        %v657 = vunpack.c.h.b16 %v403
        %v658 = vunpack.c.l.b16 %v404
        %v659 = vunpack.c.h.b16 %v404
        %v660 = vunpack.c.l.b16 %v405
        %v661 = vunpack.c.h.b16 %v405
        %v662 = vpack.c.b16 %v600, %v598
        %v663 = vpack.c.b16 %v601, %v599
        %v664 = vpack.c.b16 %v604, %v602
        %v665 = vpack.c.b16 %v605, %v603
        %v666 = vpack.c.b16 %v608, %v606
        %v667 = vpack.c.b16 %v609, %v607
        %v668 = vpack.c.b16 %v612, %v610
        %v669 = vpack.c.b16 %v613, %v611
        %v670 = vpack.c.b16 %v616, %v614
        %v671 = vpack.c.b16 %v617, %v615
        %v672 = vpack.c.b16 %v620, %v618
        %v673 = vpack.c.b16 %v621, %v619
        %v674 = vpack.c.b16 %v624, %v622
        %v675 = vpack.c.b16 %v625, %v623
        %v676 = vpack.c.b16 %v628, %v626
        %v677 = vpack.c.b16 %v629, %v627
        %v678 = vpack.c.b16 %v632, %v630
        %v679 = vpack.c.b16 %v633, %v631
        %v680 = vpack.c.b16 %v636, %v634
        %v681 = vpack.c.b16 %v637, %v635
        %v682 = vpack.c.b16 %v640, %v638
        %v683 = vpack.c.b16 %v641, %v639
        %v684 = vpack.c.b16 %v644, %v642
        %v685 = vpack.c.b16 %v645, %v643
        %v686 = vpack.c.b16 %v648, %v646
        %v687 = vpack.c.b16 %v649, %v647
        %v688 = vpack.c.b16 %v652, %v650
        %v689 = vpack.c.b16 %v653, %v651
        %v690 = vpack.c.b16 %v656, %v654
        %v691 = vpack.c.b16 %v657, %v655
        %v692 = vpack.c.b16 %v660, %v658
        %v693 = vpack.c.b16 %v661, %v659
        %726 = vmatprep.subr.bf16.mxu0 %v663
        %727 = vmatpush1.bf16.msra.mxu0 %v662
        %728 = vmatprep.subr.bf16.mxu0 %v665
        %729 = vmatpush1.bf16.msra.mxu0 %v664
        %730 = vmatprep.subr.bf16.mxu0 %v667
        %731 = vmatpush1.bf16.msra.mxu0 %v666
        %732 = vmatprep.subr.bf16.mxu0 %v669
        %733 = vmatpush1.bf16.msra.mxu0 %v668
        %734 = vmatprep.subr.bf16.mxu0 %v671
        %735 = vmatpush1.bf16.msra.mxu0 %v670
        %736 = vmatprep.subr.bf16.mxu0 %v673
        %737 = vmatpush1.bf16.msra.mxu0 %v672
        %738 = vmatprep.subr.bf16.mxu0 %v675
        %739 = vmatpush1.bf16.msra.mxu0 %v674
        %740 = vmatprep.subr.bf16.mxu0 %v677
        %741 = vmatpush1.bf16.msra.mxu0 %v676
        %742 = vmatprep.subr.bf16.mxu0 %v679
        %743 = vmatpush1.bf16.msra.mxu0 %v678
        %744 = vmatprep.subr.bf16.mxu0 %v681
        %745 = vmatpush1.bf16.msra.mxu0 %v680
        %746 = vmatprep.subr.bf16.mxu0 %v683
        %747 = vmatpush1.bf16.msra.mxu0 %v682
        %748 = vmatprep.subr.bf16.mxu0 %v685
        %749 = vmatpush1.bf16.msra.mxu0 %v684
        %750 = vmatprep.subr.bf16.mxu0 %v687
        %751 = vmatpush1.bf16.msra.mxu0 %v686
        %752 = vmatprep.subr.bf16.mxu0 %v689
        %753 = vmatpush1.bf16.msra.mxu0 %v688
        %754 = vmatprep.subr.bf16.mxu0 %v691
        %755 = vmatpush1.bf16.msra.mxu0 %v690
        %756 = vmatprep.subr.bf16.mxu0 %v693
        %757 = vmatpush1.bf16.msra.mxu0 %v692
        %758 = vmatprep.mubr.bf16.mxu0 %v549
        %759 = vmatmul.mubr.bf16.gmra.mrb[0].mxu0 %v548
        %v760 = vpop.f32.mrb[0].mxu0
        %v761 = vadd.f32 %v559, %v760
        %v762 = vpop.f32.mrb[0].mxu0
        %v763 = vadd.f32 %v563, %v762
        %v764 = vpop.f32.mrb[0].mxu0
        %v765 = vadd.f32 %v559, %v764
        %v766 = vpop.f32.mrb[0].mxu0
        %v767 = vadd.f32 %v563, %v766
        %768 = vmatprep.mubr.bf16.mxu0 %v551
        %769 = vmatmul.mubr.bf16.gmra.mrb[0].mxu0 %v550
        %v770 = vpop.f32.mrb[0].mxu0
        %v771 = vadd.f32 %v559, %v770
        %v772 = vpop.f32.mrb[0].mxu0
        %v773 = vadd.f32 %v563, %v772
        %v774 = vpop.f32.mrb[0].mxu0
        %v775 = vadd.f32 %v559, %v774
        %v776 = vpop.f32.mrb[0].mxu0
        %v777 = vadd.f32 %v563, %v776
        %778 = vmatprep.mubr.bf16.mxu0 %v553
        %779 = vmatmul.mubr.bf16.gmra.mrb[0].mxu0 %v552
        %v780 = vpop.f32.mrb[0].mxu0
        %v781 = vadd.f32 %v559, %v780
        %v782 = vpop.f32.mrb[0].mxu0
        %v783 = vadd.f32 %v563, %v782
        %v784 = vpop.f32.mrb[0].mxu0
        %v785 = vadd.f32 %v559, %v784
        %v786 = vpop.f32.mrb[0].mxu0
        %v787 = vadd.f32 %v563, %v786
        %788 = vdwg.mxu0
        %s789 = smul.u32 %s28, 8
        %v790 = vld [vmem:[%s2] sm:$0x3]
        %v791 = vstv %s789
        %v792 = vadd.s32 %v791, %v790
        %v793 = vld [vmem:[%s342] sm:$0xff]
        %v794 = vld [vmem:[%s342 + $0x8] sm:$0xff]
        %v795 = vld [vmem:[%s342 + $0x10] sm:$0xff]
        %v796 = vld [vmem:[%s342 + $0x18] sm:$0xff]
        %v797 = vld [vmem:[%s342 + $0x20] sm:$0xff]
        %v798 = vld [vmem:[%s342 + $0x28] sm:$0xff]
        %v799 = vlaneseq
        %v800 = vshrl.u32 %v799, 7
        %v801 = vsub.s32 0, %v800
        %v802 = vrot.slane %v792, %v801
        %v803 = vlaneseq
        %v804 = vshrl.u32 %v803, 7
        %v805 = vsub.s32 1, %v804
        %v806 = vrot.slane %v792, %v805
        %807 = vset.pattern.permute.xlu0 0
        %808 = vperm.xlu0 %807, %v793
        %v809 = vpop.permute.xlu0 %808
        %810 = vset.pattern.permute.xlu0 0
        %811 = vperm.xlu0 %810, %v794
        %v812 = vpop.permute.xlu0 %811
        %813 = vset.pattern.permute.xlu0 0
        %814 = vperm.xlu0 %813, %v795
        %v815 = vpop.permute.xlu0 %814
        %816 = vset.pattern.permute.xlu0 0
        %817 = vperm.xlu0 %816, %v796
        %v818 = vpop.permute.xlu0 %817
        %819 = vset.pattern.permute.xlu0 0
        %820 = vperm.xlu0 %819, %v797
        %v821 = vpop.permute.xlu0 %820
        %822 = vset.pattern.permute.xlu0 0
        %823 = vperm.xlu0 %822, %v798
        %v824 = vpop.permute.xlu0 %823
        %vm825 = vcmp.lt.s32.totalorder %v802, %v809
        %vm826 = vcmp.lt.s32.totalorder %v806, %v809
        %vm827 = vcmp.lt.s32.totalorder %v802, %v812
        %vm828 = vcmp.lt.s32.totalorder %v806, %v812
        %vm829 = vcmp.lt.s32.totalorder %v802, %v815
        %vm830 = vcmp.lt.s32.totalorder %v806, %v815
        %vm831 = vcmp.lt.s32.totalorder %v802, %v818
        %vm832 = vcmp.lt.s32.totalorder %v806, %v818
        %vm833 = vcmp.lt.s32.totalorder %v802, %v821
        %vm834 = vcmp.lt.s32.totalorder %v806, %v821
        %vm835 = vcmp.lt.s32.totalorder %v802, %v824
        %vm836 = vcmp.lt.s32.totalorder %v806, %v824
        %v837 = vld [vmem:[#allocation7] sm:$0xff]
        %v838 = vld [vmem:[#allocation7 + $0x8] sm:$0xff]
        %v839 = vld [vmem:[#allocation7 + $0x10] sm:$0xff]
        %v840 = vld [vmem:[#allocation7 + $0x18] sm:$0xff]
        %v841 = vld [vmem:[#allocation7 + $0x20] sm:$0xff]
        %v842 = vld [vmem:[#allocation7 + $0x28] sm:$0xff]
        %v843 = vld [vmem:[#allocation7 + $0x30] sm:$0xff]
        %v844 = vld [vmem:[#allocation7 + $0x38] sm:$0xff]
        %v845 = vld [vmem:[#allocation7 + $0x40] sm:$0xff]
        %v846 = vld [vmem:[#allocation7 + $0x48] sm:$0xff]
        %v847 = vld [vmem:[#allocation7 + $0x50] sm:$0xff]
        %v848 = vld [vmem:[#allocation7 + $0x58] sm:$0xff]
        %v849 = vsel %vm825, %v761, -1e+30
        %v850 = vsel %vm826, %v763, -1e+30
        %v851 = vsel %vm827, %v765, -1e+30
        %v852 = vsel %vm828, %v767, -1e+30
        %v853 = vsel %vm829, %v771, -1e+30
        %v854 = vsel %vm830, %v773, -1e+30
        %v855 = vsel %vm831, %v775, -1e+30
        %v856 = vsel %vm832, %v777, -1e+30
        %v857 = vsel %vm833, %v781, -1e+30
        %v858 = vsel %vm834, %v783, -1e+30
        %v859 = vsel %vm835, %v785, -1e+30
        %v860 = vsel %vm836, %v787, -1e+30
        %v861 = vmax.f32 %v837, %v849
        %v862 = vmax.f32 %v838, %v850
        %v863 = vmax.f32 %v839, %v851
        %v864 = vmax.f32 %v840, %v852
        %v865 = vmax.f32 %v841, %v853
        %v866 = vmax.f32 %v842, %v854
        %v867 = vmax.f32 %v843, %v855
        %v868 = vmax.f32 %v844, %v856
        %v869 = vmax.f32 %v845, %v857
        %v870 = vmax.f32 %v846, %v858
        %v871 = vmax.f32 %v847, %v859
        %v872 = vmax.f32 %v848, %v860
        %873 = vst [vmem:[#allocation7] sm:$0xff] %v861
        %874 = vst [vmem:[#allocation7 + $0x8] sm:$0xff] %v862
        %875 = vst [vmem:[#allocation7 + $0x10] sm:$0xff] %v863
        %876 = vst [vmem:[#allocation7 + $0x18] sm:$0xff] %v864
        %877 = vst [vmem:[#allocation7 + $0x20] sm:$0xff] %v865
        %878 = vst [vmem:[#allocation7 + $0x28] sm:$0xff] %v866
        %879 = vst [vmem:[#allocation7 + $0x30] sm:$0xff] %v867
        %880 = vst [vmem:[#allocation7 + $0x38] sm:$0xff] %v868
        %881 = vst [vmem:[#allocation7 + $0x40] sm:$0xff] %v869
        %882 = vst [vmem:[#allocation7 + $0x48] sm:$0xff] %v870
        %883 = vst [vmem:[#allocation7 + $0x50] sm:$0xff] %v871
        %884 = vst [vmem:[#allocation7 + $0x58] sm:$0xff] %v872
        // Predicated region
        $region61: #{tpu_custom_call.1} parent=47 // pred_check
          %p885 = pneg %p212
        $region62: #{tpu_custom_call.1} parent=47 // pred_check_branch
          %887 = sbr.rel (%p885) target = $region64
        $region63: #{tpu_custom_call.1} parent=47 // pred_region
          %s888 = smul.u32 6, %s27
          %s890 = ssub.s32 1536, 1536
          %891 = vsyncadd [#allocation4], %s890
          %s892 = smul.addr %s888, 2
          %s893 = smul.addr %s892, 128
          %s894 = scalar_lea.hbm %s7, %s893
          %s895 = sshll.u32 [#allocation7], 4
          %s896 = int_to_ptr.vmem [resolvable:$true] %s895
          %901 = dma.vmem_to_hbm [thread:$0]  %s896, 1536, %s894, [#allocation4], 256, 256, 16
        $region64: #{tpu_custom_call.1} parent=47 // pred_fallthru
          _
        // Predicated region
        $region65: #{tpu_custom_call.1} parent=47 // pred_check
          %p902 = pneg %p212
        $region66: #{tpu_custom_call.1} parent=47 // pred_check_branch
          %904 = sbr.rel (%p902) target = $region68
        $region67: #{tpu_custom_call.1} parent=47 // pred_region
          %905 = dma.done [#allocation4], 1536
        $region68: #{tpu_custom_call.1} parent=47 // pred_fallthru
          _
      $region48: #{tpu_custom_call.1} parent=5 // pred_fallthru
        _
      %p906 = scmp.le.s32.totalorder 2, %s18
      // Predicated region
      $region69: #{tpu_custom_call.1} parent=5 // pred_check
        %p907 = pneg %p906
      $region70: #{tpu_custom_call.1} parent=5 // pred_check_branch
        %909 = sbr.rel (%p907) target = $region72
      $region71: #{tpu_custom_call.1} parent=5 // pred_region
        %s910 = ssub.s32 %s18, 2
      $region72: #{tpu_custom_call.1} parent=5 // pred_fallthru
        _
    $region6: #{tpu_custom_call.1} parent=1 // loop_footer
      %s22 = sadd.s32 1, %s18
    $region7: #{tpu_custom_call.1} parent=1 // loop_footer_branch
      %17 = sbr.rel target = $region3
    $region8: #{tpu_custom_call.1} parent=1 // loop_exit
      _
    %911 = vsyncpa [#allocation3], 1
    %s912 = scalar_lea.sflag [#allocation3], 1
    %913 = vsyncpa %s912, 1
    %914 = vsyncpa [#allocation6], 1
    %915 = vsyncpa [#allocation4], 1
    %s916 = scalar_lea.sflag [#allocation4], 1
    %917 = vsyncpa %s916, 1

</llo_original>
